<compile_context>
chip_gen: v7x
topology: tpu7x:2x2x1
jax: 0.10.0
libtpu: 0.0.40
codegen_flags: <defaults>
</compile_context>

<pallas_src>
import numpy as np
import jax
import jax.numpy as jnp
from jax.experimental import pallas as pl
from jax.experimental.pallas import tpu as pltpu


# ----------------------------------------------------------------------------
# Small helpers
# ----------------------------------------------------------------------------
def _cdiv(a, b):
    return -(-a // b)


def _round_up(a, b):
    return _cdiv(a, b) * b


# ----------------------------------------------------------------------------
# Operator construction (tiny numpy matrices, done once at trace time)
# ----------------------------------------------------------------------------
def _subsample_matrix(in_size: int) -> np.ndarray:
    """AvgPool/MaxPool with kernel_size=1, stride=2 along one axis."""
    out_size = (in_size - 1) // 2 + 1
    m = np.zeros((out_size, in_size), dtype=np.float32)
    m[np.arange(out_size), np.arange(out_size) * 2] = 1.0
    return m


def _upsample_matrix(in_size: int, out_size: int) -> np.ndarray:
    """PyTorch trilinear (align_corners=False) interpolation along one axis."""
    m = np.zeros((out_size, in_size), dtype=np.float32)
    scale = in_size / out_size
    for o in range(out_size):
        src = max((o + 0.5) * scale - 0.5, 0.0)
        i0 = min(int(np.floor(src)), in_size - 1)
        i1 = i0 + 1 if i0 < in_size - 1 else i0
        lam = src - i0
        m[o, i0] += 1.0 - lam
        m[o, i1] += lam
    return m


def _compose_axis_operator(size: int, n: int) -> np.ndarray:
    """n strided subsamples + (n-1) x2 upsamples + final upsample back to `size`."""
    op = np.eye(size, dtype=np.float32)
    cur = size
    for _ in range(n):                       # encoder: stride-2 subsample
        s = _subsample_matrix(cur)
        op = s @ op
        cur = s.shape[0]
    for _ in range(n - 1):                   # decoder: scale-factor-2 stages
        u = _upsample_matrix(cur, cur * 2)
        op = u @ op
        cur *= 2
    op = _upsample_matrix(cur, size) @ op    # final Upsample(size=original)
    return op                                # (size, size)


# ----------------------------------------------------------------------------
# Generation-aware VMEM / tiling plan
# ----------------------------------------------------------------------------
def _vmem_capacity_bytes() -> int:
    try:
        return int(pltpu.get_tpu_info().vmem_capacity_bytes)
    except Exception:
        return 64 << 20          # conservative fallback: v7x physical VMEM per TC


def _tile_plan(m_rows: int, bytes_per_row: int, dsize: int):
    """Rows per grid step + vmem limit.

    bytes_per_row should account for double-buffered in/out blocks plus in-kernel
    temporaries.  Rows are rounded to the dtype's sublane pack; the grid is kept
    >= 2 steps whenever possible (v7x megacore), and a single block always equals
    the full row extent (legal regardless of pack alignment).
    """
    vmem = _vmem_capacity_bytes()
    vmem_limit = min(vmem // 2, 64 << 20)      # 64 MiB on v5e/v6e, 32 MiB on v7x
    budget = (vmem_limit * 3) // 5             # headroom for operators/overheads
    pack = max(8, 32 // dsize)                 # 8 f32 / 16 bf16 / 32 int8 sublane pack
    tb = max(pack, (budget // max(bytes_per_row, 1)) // pack * pack)
    if m_rows >= 2 * pack:                     # keep >= 2 grid steps for megacore
        tb = min(tb, _round_up(_cdiv(m_rows, 2), pack))
    if tb >= m_rows:
        tb = m_rows                            # single block == full dim (always legal)
    return tb, vmem_limit


def _try_single_buffered(call):
    """Prefer single-buffered resident operators (their block index is constant);
    fall back to default double-buffering if this jax version rejects Buffered(1)."""
    try:
        return call(True)
    except Exception:
        return call(False)


# ----------------------------------------------------------------------------
# Kernel 1: fused kron path  ---  out_tile = x_tile @ kron(L_H, L_W)^T
# ----------------------------------------------------------------------------
def _rows_matmul_kernel(opT_ref, x_ref, o_ref):
    o_ref[...] = jnp.dot(
        x_ref[...], opT_ref[...], preferred_element_type=jnp.float32
    ).astype(o_ref.dtype)


def _apply_operator_rows(x2d: jax.Array, opT: jax.Array, out_dtype) -> jax.Array:
    """out(M, K2) = x2d(M, K) @ opT(K, K2); rows tiled over a 1-D 'parallel' grid."""
    M, K = x2d.shape
    K2 = opT.shape[1]
    dsize = np.dtype(x2d.dtype).itemsize
    # double-buffered in/out rows + f32 dot result temporary
    tb, vmem_limit = _tile_plan(M, 2 * (K + K2) * dsize + K2 * 4, dsize)
    grid = (_cdiv(M, tb),)        # no wrapper pad: partial last block is masked
    cost = pl.CostEstimate(
        flops=2 * M * K * K2, transcendentals=0,
        bytes_accessed=(M * K + M * K2 + K * K2) * dsize)

    def call(single_buffer_op):
        op_kwargs = {"pipeline_mode": pl.Buffered(1)} if single_buffer_op else {}
        return pl.pallas_call(
            _rows_matmul_kernel,
            out_shape=jax.ShapeDtypeStruct((M, K2), out_dtype),
            grid_spec=pl.GridSpec(
                grid=grid,
                in_specs=[
                    pl.BlockSpec((K, K2), lambda b: (0, 0), **op_kwargs),  # resident op
                    pl.BlockSpec((tb, K), lambda b: (b, 0)),               # row tile
                ],
                out_specs=pl.BlockSpec((tb, K2), lambda b: (b, 0)),
            ),
            compiler_params=pltpu.CompilerParams(
                dimension_semantics=("parallel",),
                vmem_limit_bytes=vmem_limit),
            cost_estimate=cost,
        )(opT, x2d)

    return _try_single_buffered(call)


# ----------------------------------------------------------------------------
# Kernel 2: fused separable path  ---  out[m] = L_H @ x[m] @ L_W^T  (large H*W)
# ----------------------------------------------------------------------------
def _separable_kernel(lwT_ref, lhT_ref, x_ref, o_ref):
    # x_ref: (tb, H, W).  Both axis operators are applied entirely in VMEM
    # (two MXU passes with an XLU transpose sandwich); one write per tile.
    tb, H, W = x_ref.shape
    cdt = lwT_ref.dtype
    y = jnp.dot(x_ref[...].reshape(tb * H, W), lwT_ref[...],
                preferred_element_type=jnp.float32)            # apply L_W^T
    y = y.reshape(tb, H, W).astype(cdt)
    yt = jnp.swapaxes(y, 1, 2).reshape(tb * W, H)               # XLU transpose
    z = jnp.dot(yt, lhT_ref[...], preferred_element_type=jnp.float32)  # apply L_H^T
    z = jnp.swapaxes(z.reshape(tb, W, H), 1, 2)
    # NOTE: the stored lane dim is W; for the shapes where this path triggers
    # (large H*W) W is typically >= 128, keeping the stores lane-dense.
    o_ref[...] = z.astype(o_ref.dtype)


def _apply_operator_separable(x3d: jax.Array, lhT: jax.Array, lwT: jax.Array,
                              out_dtype) -> jax.Array:
    """out(M,H,W)[m] = L_H @ x3d[m] @ L_W^T, fused per row tile (one HBM pass)."""
    M, H, W = x3d.shape
    dsize = np.dtype(x3d.dtype).itemsize
    # double-buffered in/out rows + generous allowance for in-kernel temporaries
    tb, vmem_limit = _tile_plan(M, 4 * H * W * dsize + 8 * H * W * 4, dsize)
    grid = (_cdiv(M, tb),)
    cost = pl.CostEstimate(
        flops=2 * M * H * W * (H + W), transcendentals=0,
        bytes_accessed=2 * M * H * W * dsize + (H * H + W * W) * dsize)

    def call(single_buffer_op):
        op_kwargs = {"pipeline_mode": pl.Buffered(1)} if single_buffer_op else {}
        return pl.pallas_call(
            _separable_kernel,
            out_shape=jax.ShapeDtypeStruct((M, H, W), out_dtype),
            grid_spec=pl.GridSpec(
                grid=grid,
                in_specs=[
                    pl.BlockSpec((W, W), lambda b: (0, 0), **op_kwargs),   # L_W^T
                    pl.BlockSpec((H, H), lambda b: (0, 0), **op_kwargs),   # L_H^T
                    pl.BlockSpec((tb, H, W), lambda b: (b, 0, 0)),         # row tile
                ],
                out_specs=pl.BlockSpec((tb, H, W), lambda b: (b, 0, 0)),
            ),
            compiler_params=pltpu.CompilerParams(
                dimension_semantics=("parallel",),
                vmem_limit_bytes=vmem_limit),
            cost_estimate=cost,
        )(lwT, lhT, x3d)

    return _try_single_buffered(call)


# ----------------------------------------------------------------------------
# Forward
# ----------------------------------------------------------------------------
def noconv_ae_forward(x: jax.Array, n: int, *,
                      kron_hw_limit: int = 512,
                      compute_dtype=None) -> jax.Array:
    """Pallas implementation of NoConvAE(n, 'spatial', 'Avg').forward.

    kron_hw_limit: use the fused kron matmul while H*W stays below the
        HBM/MXU arithmetic-intensity crossover (~240 flops/byte on v5e,
        ~310 per-TC on v7x); above it the fused separable kernel is cheaper.
    compute_dtype: optional (e.g. jnp.bfloat16) to halve HBM traffic on this
        bandwidth-bound path; accumulation stays f32, output keeps x.dtype.
    """
    N, D, H, W = x.shape
    out_dtype = x.dtype
    cdt = jnp.dtype(compute_dtype) if compute_dtype is not None else x.dtype
    xin = x.astype(cdt) if cdt != x.dtype else x

    lh = _compose_axis_operator(H, n)                        # (H, H) f32
    lw = _compose_axis_operator(W, n)                        # (W, W) f32

    if H * W <= kron_hw_limit:
        # Fused path: out_flat = x_flat @ kron(L_H, L_W)^T — lane-dense (H*W lanes).
        kT = jnp.asarray(np.kron(lh, lw).T, dtype=cdt)       # (HW, HW)
        out = _apply_operator_rows(xin.reshape(N * D, H * W), kT, out_dtype)
        return out.reshape(N, D, H, W)

    # Large H*W: single fused separable kernel (no wrapper transposes, one HBM pass).
    lwT = jnp.asarray(lw.T, dtype=cdt)                       # (W, W)
    lhT = jnp.asarray(lh.T, dtype=cdt)                       # (H, H)
    out = _apply_operator_separable(xin.reshape(N * D, H, W), lhT, lwT, out_dtype)
    return out.reshape(N, D, H, W)


# ----------------------------------------------------------------------------
# Exact numpy reference (float64, stage by stage) — deliberately independent of
# TPU matmul defaults (XLA rounds f32 dots to bf16 by default on TPU).
# ----------------------------------------------------------------------------
def noconv_ae_reference(x: np.ndarray, n: int) -> np.ndarray:
    y = np.asarray(x, dtype=np.float64)
    N, D, H, W = y.shape
    for _ in range(n):                                       # encoder: stride-2 subsample
        y = y[:, :, ::2, ::2]
    for _ in range(n - 1):                                   # decoder: x2 trilinear
        ah = _upsample_matrix(y.shape[2], y.shape[2] * 2).astype(np.float64)
        aw = _upsample_matrix(y.shape[3], y.shape[3] * 2).astype(np.float64)
        y = np.einsum("oh,ndhw->ndow", ah, y)
        y = np.einsum("pw,ndhw->ndhp", aw, y)
    ah = _upsample_matrix(y.shape[2], H).astype(np.float64)  # final upsample to (D,H,W)
    aw = _upsample_matrix(y.shape[3], W).astype(np.float64)
    y = np.einsum("oh,ndhw->ndow", ah, y)
    y = np.einsum("pw,ndhw->ndhp", aw, y)
    return y


if __name__ == "__main__":
    key = jax.random.PRNGKey(0)
    N, D, H, W = 2, 4, 16, 16
    n = 2
    x = jax.random.normal(key, (N, D, H, W), dtype=jnp.float32)

    ref = noconv_ae_reference(np.asarray(x), n)

    # Default (fused kron matmul) path.
    out = jax.block_until_ready(noconv_ae_forward(x, n))
    assert out.shape == (N, D, H, W)
    assert out.dtype == x.dtype
    assert np.allclose(np.asarray(out), ref, atol=1e-4, rtol=1e-4), \
        "kron path mismatch vs reference"

    # Fused separable path (used automatically for large H*W) — forced here at the
    # small shape so the fallback is validated too.
    out_sep = jax.block_until_ready(noconv_ae_forward(x, n, kron_hw_limit=0))
    assert np.allclose(np.asarray(out_sep), ref, atol=1e-4, rtol=1e-4), \
        "separable path mismatch vs reference"

    print("KERNEL_OK")
</pallas_src>

<mosaic_0001>
module attributes {stable_mosaic.version = 11 : i64} {
  func.func @_rows_matmul_kernel(%arg0: i32, %arg1: memref<256x256xf32, #tpu.memory_space<vmem>>, %arg2: memref<8x256xf32, #tpu.memory_space<vmem>>, %arg3: memref<8x256xf32, #tpu.memory_space<vmem>>) attributes {dimension_semantics = [#tpu.dimension_semantics<parallel>], iteration_bounds = array<i64: 1>, scalar_prefetch = 0 : i64, scratch_operands = 0 : i64, tpu.core_type = #tpu.core_type<tc>, window_params = [{pipeline_mode = #tpu.pipeline_mode<synchronous>, transform_indices = @transform_0, window_bounds = array<i64: 256, 256>}, {transform_indices = @transform_1, window_bounds = array<i64: 8, 256>}, {transform_indices = @transform_2, window_bounds = array<i64: 8, 256>}]} {
    %c0 = arith.constant 0 : index
    %c0_0 = arith.constant 0 : index
    %0 = vector.load %arg2[%c0, %c0_0] : memref<8x256xf32, #tpu.memory_space<vmem>>, vector<8x256xf32>
    %c0_1 = arith.constant 0 : index
    %c0_2 = arith.constant 0 : index
    %1 = vector.load %arg1[%c0_1, %c0_2] : memref<256x256xf32, #tpu.memory_space<vmem>>, vector<256x256xf32>
    %cst = arith.constant dense<0.000000e+00> : vector<8x256xf32>
    %2 = tpu.matmul %0, %1, %cst {dimension_numbers = #tpu.dot_dimension_numbers<[1], [0], [0], [1], [0, 0, 1, 1], [], []>} : vector<8x256xf32>, vector<256x256xf32>, vector<8x256xf32> -> vector<8x256xf32>
    %c0_3 = arith.constant 0 : index
    %c0_4 = arith.constant 0 : index
    %3 = vector.load %arg3[%c0_3, %c0_4] : memref<8x256xf32, #tpu.memory_space<vmem>>, vector<8x256xf32>
    tpu.vector_store %arg3[%c0_3, %c0_4], %2 {strides = array<i32>} : memref<8x256xf32, #tpu.memory_space<vmem>>, vector<8x256xf32>,
    return
  }
  func.func @transform_0(%arg0: i32) -> (i32, i32) {
    %c0_i32 = arith.constant 0 : i32
    %c0_i32_0 = arith.constant 0 : i32
    %c0_i32_1 = arith.constant 0 : i32
    return %c0_i32, %c0_i32_0 : i32, i32
  }
  func.func @transform_1(%arg0: i32) -> (i32, i32) {
    %c0_i32 = arith.constant 0 : i32
    %c0_i32_0 = arith.constant 0 : i32
    return %arg0, %c0_i32 : i32, i32
  }
  func.func @transform_2(%arg0: i32) -> (i32, i32) {
    %c0_i32 = arith.constant 0 : i32
    %c0_i32_0 = arith.constant 0 : i32
    return %arg0, %c0_i32 : i32, i32
  }
}

module attributes {stable_mosaic.version = 11 : i64} {
  func.func @_rows_matmul_kernel(%arg0: i32, %arg1: memref<256x256xf32, #tpu.memory_space<vmem>>, %arg2: memref<8x256xf32, #tpu.memory_space<vmem>>, %arg3: memref<8x256xf32, #tpu.memory_space<vmem>>) attributes {dimension_semantics = [#tpu.dimension_semantics<parallel>], iteration_bounds = array<i64: 1>, scalar_prefetch = 0 : i64, scratch_operands = 0 : i64, tpu.core_type = #tpu.core_type<tc>, window_params = [{pipeline_mode = #tpu.pipeline_mode<synchronous>, transform_indices = @transform_0, window_bounds = array<i64: 256, 256>}, {transform_indices = @transform_1, window_bounds = array<i64: 8, 256>}, {transform_indices = @transform_2, window_bounds = array<i64: 8, 256>}]} {
    %c0 = arith.constant 0 : index
    %c0_0 = arith.constant 0 : index
    %0 = vector.load %arg2[%c0, %c0_0] : memref<8x256xf32, #tpu.memory_space<vmem>>, vector<8x256xf32>
    %c0_1 = arith.constant 0 : index
    %c0_2 = arith.constant 0 : index
    %1 = vector.load %arg1[%c0_1, %c0_2] : memref<256x256xf32, #tpu.memory_space<vmem>>, vector<256x256xf32>
    %cst = arith.constant dense<0.000000e+00> : vector<8x256xf32>
    %2 = tpu.matmul %0, %1, %cst {dimension_numbers = #tpu.dot_dimension_numbers<[1], [0], [0], [1], [0, 0, 1, 1], [], []>} : vector<8x256xf32>, vector<256x256xf32>, vector<8x256xf32> -> vector<8x256xf32>
    %c0_3 = arith.constant 0 : index
    %c0_4 = arith.constant 0 : index
    %3 = vector.load %arg3[%c0_3, %c0_4] : memref<8x256xf32, #tpu.memory_space<vmem>>, vector<8x256xf32>
    tpu.vector_store %arg3[%c0_3, %c0_4], %2 {strides = array<i32>} : memref<8x256xf32, #tpu.memory_space<vmem>>, vector<8x256xf32>,
    return
  }
  func.func @transform_0(%arg0: i32) -> (i32, i32) {
    %c0_i32 = arith.constant 0 : i32
    %c0_i32_0 = arith.constant 0 : i32
    %c0_i32_1 = arith.constant 0 : i32
    return %c0_i32, %c0_i32_0 : i32, i32
  }
  func.func @transform_1(%arg0: i32) -> (i32, i32) {
    %c0_i32 = arith.constant 0 : i32
    %c0_i32_0 = arith.constant 0 : i32
    return %arg0, %c0_i32 : i32, i32
  }
  func.func @transform_2(%arg0: i32) -> (i32, i32) {
    %c0_i32 = arith.constant 0 : i32
    %c0_i32_0 = arith.constant 0 : i32
    return %arg0, %c0_i32 : i32, i32
  }
}

</mosaic_0001>

<llo_original>
// kernel: tpu_custom_call.1
$region0: #{tpu_custom_call.1}
  #allocation0 [shape = 'u32[]', space=smem, size = 0x4, offset = 0x4, fixed_abs, tag = 'smem constant byte address 0x4 - core index']
  #allocation1 [shape = 'u32[144,128]{1,0:T(1,128)}', space=vmem, size = 0x12000, scoped, tag = 'internal scratch']
  %s0 = inlined_call_operand.hbm [shape: f32[256,256], index: 0, kind: input, shape index: {}]
  %s1 = inlined_call_operand.hbm [shape: f32[8,256], index: 1, kind: input, shape index: {}]
  %s2 = inlined_call_operand.hbm [shape: f32[8,256], index: 2, kind: output, shape index: {}]
  %s3 = sld [smem:[#allocation0]]
  $region26: #{tpu_custom_call.1} parent=0
    _
  %s5 = ssub.s32 1, %s3
  %s6 = scalar_select 0, %s5, %s3
  $region1: #{tpu_custom_call.1} parent=0
    #allocation2 [shape = 'u8[262144]{0}', space=vmem, size = 0x40000, scoped, tag = 'input window, operand 0, single buffered']
    #allocation3 [shape = 's32[1]{0}', space=sflag, size = 0x4, scoped, tag = 'scoped memory for tpu_custom_call.1']
    #allocation4 [shape = 's32[1]{0}', space=sflag, size = 0x4, scoped, tag = 'scoped memory for tpu_custom_call.1']
    #allocation5 [shape = 'u8[8192]{0}', space=vmem, size = 0x2000, scoped, tag = 'input window, operand 1, single buffered']
    #allocation6 [shape = 's32[1]{0}', space=sflag, size = 0x4, scoped, tag = 'scoped memory for tpu_custom_call.1']
    #allocation7 [shape = 'u8[8192]{0}', space=vmem, size = 0x2000, scoped, tag = 'output window, operand 0, single buffered']
    %7 = vsyncpa [#allocation3], 0
    %8 = vsyncpa [#allocation6], 0
    %9 = vsyncpa [#allocation4], 0
    // Predicated region
    $region2: #{tpu_custom_call.1} parent=1 // pred_check
      _
    $region3: #{tpu_custom_call.1} parent=1 // pred_check_branch
      %11 = sbr.rel (0) target = $region5
    $region4: #{tpu_custom_call.1} parent=1 // pred_region
      %s13 = ssub.s32 8192, 8192
      %14 = vsyncadd [#allocation3], %s13
      %s15 = sshll.u32 [#allocation2], 4
      %s16 = int_to_ptr.vmem [resolvable:$true] %s15
      %21 = dma.hbm_to_vmem [thread:$0]  %s0, 8192, %s16, [#allocation3], 256, 256, 16
    $region5: #{tpu_custom_call.1} parent=1 // pred_fallthru
      _
    // Predicated region
    $region6: #{tpu_custom_call.1} parent=1 // pred_check
      _
    $region7: #{tpu_custom_call.1} parent=1 // pred_check_branch
      %23 = sbr.rel (0) target = $region9
    $region8: #{tpu_custom_call.1} parent=1 // pred_region
      %s25 = ssub.s32 256, 256
      %26 = vsyncadd [#allocation6], %s25
      %s28 = sshll.u32 [#allocation5], 4
      %s29 = int_to_ptr.vmem [resolvable:$true] %s28
      %31 = dma.hbm_to_vmem [thread:$0]  %s1, 256, %s29, [#allocation6]
    $region9: #{tpu_custom_call.1} parent=1 // pred_fallthru
      _
    // Predicated region
    $region10: #{tpu_custom_call.1} parent=1 // pred_check
      _
    $region11: #{tpu_custom_call.1} parent=1 // pred_check_branch
      %33 = sbr.rel (0) target = $region13
    $region12: #{tpu_custom_call.1} parent=1 // pred_region
      %34 = dma.done [#allocation3], 8192
    $region13: #{tpu_custom_call.1} parent=1 // pred_fallthru
      _
    // Predicated region
    $region14: #{tpu_custom_call.1} parent=1 // pred_check
      _
    $region15: #{tpu_custom_call.1} parent=1 // pred_check_branch
      %36 = sbr.rel (0) target = $region17
    $region16: #{tpu_custom_call.1} parent=1 // pred_region
      %37 = dma.done [#allocation6], 256
    $region17: #{tpu_custom_call.1} parent=1 // pred_fallthru
      _
    %v38 = vld [vmem:[#allocation5] sm:$0xff]
    %v39 = vld [vmem:[#allocation5 + $0x8] sm:$0xff]
    %v40 = vld [vmem:[#allocation2] sm:$0xff]
    %v41 = vld [vmem:[#allocation2 + $0x8] sm:$0xff]
    %v42 = vld [vmem:[#allocation2 + $0x10] sm:$0xff]
    %v43 = vld [vmem:[#allocation2 + $0x18] sm:$0xff]
    %v44 = vld [vmem:[#allocation2 + $0x20] sm:$0xff]
    %v45 = vld [vmem:[#allocation2 + $0x28] sm:$0xff]
    %v46 = vld [vmem:[#allocation2 + $0x30] sm:$0xff]
    %v47 = vld [vmem:[#allocation2 + $0x38] sm:$0xff]
    %v48 = vld [vmem:[#allocation2 + $0x40] sm:$0xff]
    %v49 = vld [vmem:[#allocation2 + $0x48] sm:$0xff]
    %v50 = vld [vmem:[#allocation2 + $0x50] sm:$0xff]
    %v51 = vld [vmem:[#allocation2 + $0x58] sm:$0xff]
    %v52 = vld [vmem:[#allocation2 + $0x60] sm:$0xff]
    %v53 = vld [vmem:[#allocation2 + $0x68] sm:$0xff]
    %v54 = vld [vmem:[#allocation2 + $0x70] sm:$0xff]
    %v55 = vld [vmem:[#allocation2 + $0x78] sm:$0xff]
    %v56 = vld [vmem:[#allocation2 + $0x80] sm:$0xff]
    %v57 = vld [vmem:[#allocation2 + $0x88] sm:$0xff]
    %v58 = vld [vmem:[#allocation2 + $0x90] sm:$0xff]
    %v59 = vld [vmem:[#allocation2 + $0x98] sm:$0xff]
    %v60 = vld [vmem:[#allocation2 + $0xa0] sm:$0xff]
    %v61 = vld [vmem:[#allocation2 + $0xa8] sm:$0xff]
    %v62 = vld [vmem:[#allocation2 + $0xb0] sm:$0xff]
    %v63 = vld [vmem:[#allocation2 + $0xb8] sm:$0xff]
    %v64 = vld [vmem:[#allocation2 + $0xc0] sm:$0xff]
    %v65 = vld [vmem:[#allocation2 + $0xc8] sm:$0xff]
    %v66 = vld [vmem:[#allocation2 + $0xd0] sm:$0xff]
    %v67 = vld [vmem:[#allocation2 + $0xd8] sm:$0xff]
    %v68 = vld [vmem:[#allocation2 + $0xe0] sm:$0xff]
    %v69 = vld [vmem:[#allocation2 + $0xe8] sm:$0xff]
    %v70 = vld [vmem:[#allocation2 + $0xf0] sm:$0xff]
    %v71 = vld [vmem:[#allocation2 + $0xf8] sm:$0xff]
    %v72 = vld [vmem:[#allocation2 + $0x100] sm:$0xff]
    %v73 = vld [vmem:[#allocation2 + $0x108] sm:$0xff]
    %v74 = vld [vmem:[#allocation2 + $0x110] sm:$0xff]
    %v75 = vld [vmem:[#allocation2 + $0x118] sm:$0xff]
    %v76 = vld [vmem:[#allocation2 + $0x120] sm:$0xff]
    %v77 = vld [vmem:[#allocation2 + $0x128] sm:$0xff]
    %v78 = vld [vmem:[#allocation2 + $0x130] sm:$0xff]
    %v79 = vld [vmem:[#allocation2 + $0x138] sm:$0xff]
    %v80 = vld [vmem:[#allocation2 + $0x140] sm:$0xff]
    %v81 = vld [vmem:[#allocation2 + $0x148] sm:$0xff]
    %v82 = vld [vmem:[#allocation2 + $0x150] sm:$0xff]
    %v83 = vld [vmem:[#allocation2 + $0x158] sm:$0xff]
    %v84 = vld [vmem:[#allocation2 + $0x160] sm:$0xff]
    %v85 = vld [vmem:[#allocation2 + $0x168] sm:$0xff]
    %v86 = vld [vmem:[#allocation2 + $0x170] sm:$0xff]
    %v87 = vld [vmem:[#allocation2 + $0x178] sm:$0xff]
    %v88 = vld [vmem:[#allocation2 + $0x180] sm:$0xff]
    %v89 = vld [vmem:[#allocation2 + $0x188] sm:$0xff]
    %v90 = vld [vmem:[#allocation2 + $0x190] sm:$0xff]
    %v91 = vld [vmem:[#allocation2 + $0x198] sm:$0xff]
    %v92 = vld [vmem:[#allocation2 + $0x1a0] sm:$0xff]
    %v93 = vld [vmem:[#allocation2 + $0x1a8] sm:$0xff]
    %v94 = vld [vmem:[#allocation2 + $0x1b0] sm:$0xff]
    %v95 = vld [vmem:[#allocation2 + $0x1b8] sm:$0xff]
    %v96 = vld [vmem:[#allocation2 + $0x1c0] sm:$0xff]
    %v97 = vld [vmem:[#allocation2 + $0x1c8] sm:$0xff]
    %v98 = vld [vmem:[#allocation2 + $0x1d0] sm:$0xff]
    %v99 = vld [vmem:[#allocation2 + $0x1d8] sm:$0xff]
    %v100 = vld [vmem:[#allocation2 + $0x1e0] sm:$0xff]
    %v101 = vld [vmem:[#allocation2 + $0x1e8] sm:$0xff]
    %v102 = vld [vmem:[#allocation2 + $0x1f0] sm:$0xff]
    %v103 = vld [vmem:[#allocation2 + $0x1f8] sm:$0xff]
    %104 = vmatprep.subr.mxu0 %v41
    %105 = vmatpush1.msra.mxu0 %v40
    %106 = vmatprep.subr.mxu0 %v43
    %107 = vmatpush1.msra.mxu0 %v42
    %108 = vmatprep.subr.mxu0 %v45
    %109 = vmatpush1.msra.mxu0 %v44
    %110 = vmatprep.subr.mxu0 %v47
    %111 = vmatpush1.msra.mxu0 %v46
    %112 = vmatprep.subr.mxu0 %v49
    %113 = vmatpush1.msra.mxu0 %v48
    %114 = vmatprep.subr.mxu0 %v51
    %115 = vmatpush1.msra.mxu0 %v50
    %116 = vmatprep.subr.mxu0 %v53
    %117 = vmatpush1.msra.mxu0 %v52
    %118 = vmatprep.subr.mxu0 %v55
    %119 = vmatpush1.msra.mxu0 %v54
    %120 = vmatprep.subr.mxu0 %v57
    %121 = vmatpush1.msra.mxu0 %v56
    %122 = vmatprep.subr.mxu0 %v59
    %123 = vmatpush1.msra.mxu0 %v58
    %124 = vmatprep.subr.mxu0 %v61
    %125 = vmatpush1.msra.mxu0 %v60
    %126 = vmatprep.subr.mxu0 %v63
    %127 = vmatpush1.msra.mxu0 %v62
    %128 = vmatprep.subr.mxu0 %v65
    %129 = vmatpush1.msra.mxu0 %v64
    %130 = vmatprep.subr.mxu0 %v67
    %131 = vmatpush1.msra.mxu0 %v66
    %132 = vmatprep.subr.mxu0 %v69
    %133 = vmatpush1.msra.mxu0 %v68
    %134 = vmatprep.subr.mxu0 %v71
    %135 = vmatpush1.msra.mxu0 %v70
    %136 = vmatprep.subr.mxu0 %v73
    %137 = vmatpush1.msra.mxu0 %v72
    %138 = vmatprep.subr.mxu0 %v75
    %139 = vmatpush1.msra.mxu0 %v74
    %140 = vmatprep.subr.mxu0 %v77
    %141 = vmatpush1.msra.mxu0 %v76
    %142 = vmatprep.subr.mxu0 %v79
    %143 = vmatpush1.msra.mxu0 %v78
    %144 = vmatprep.subr.mxu0 %v81
    %145 = vmatpush1.msra.mxu0 %v80
    %146 = vmatprep.subr.mxu0 %v83
    %147 = vmatpush1.msra.mxu0 %v82
    %148 = vmatprep.subr.mxu0 %v85
    %149 = vmatpush1.msra.mxu0 %v84
    %150 = vmatprep.subr.mxu0 %v87
    %151 = vmatpush1.msra.mxu0 %v86
    %152 = vmatprep.subr.mxu0 %v89
    %153 = vmatpush1.msra.mxu0 %v88
    %154 = vmatprep.subr.mxu0 %v91
    %155 = vmatpush1.msra.mxu0 %v90
    %156 = vmatprep.subr.mxu0 %v93
    %157 = vmatpush1.msra.mxu0 %v92
    %158 = vmatprep.subr.mxu0 %v95
    %159 = vmatpush1.msra.mxu0 %v94
    %160 = vmatprep.subr.mxu0 %v97
    %161 = vmatpush1.msra.mxu0 %v96
    %162 = vmatprep.subr.mxu0 %v99
    %163 = vmatpush1.msra.mxu0 %v98
    %164 = vmatprep.subr.mxu0 %v101
    %165 = vmatpush1.msra.mxu0 %v100
    %166 = vmatprep.subr.mxu0 %v103
    %167 = vmatpush1.msra.mxu0 %v102
    %168 = vmatprep.mubr.f32.mxu0 %v39
    %169 = vmatmul.mubr.f32.gmra.mrb[0].mxu0 %v38
    %v170 = vpop.f32.mrb[0].mxu0
    %v171 = vadd.f32 0.0, %v170
    %v172 = vpop.f32.mrb[0].mxu0
    %v173 = vadd.f32 0.0, %v172
    %174 = vdwg.mxu0
    %175 = vst [vmem:[#allocation7] sm:$0xff] %v171
    %176 = vst [vmem:[#allocation7 + $0x8] sm:$0xff] %v173
    // Predicated region
    $region18: #{tpu_custom_call.1} parent=1 // pred_check
      _
    $region19: #{tpu_custom_call.1} parent=1 // pred_check_branch
      %178 = sbr.rel (0) target = $region21
    $region20: #{tpu_custom_call.1} parent=1 // pred_region
      %s180 = ssub.s32 256, 256
      %181 = vsyncadd [#allocation4], %s180
      %s183 = sshll.u32 [#allocation7], 4
      %s184 = int_to_ptr.vmem [resolvable:$true] %s183
      %186 = dma.vmem_to_hbm [thread:$0]  %s184, 256, %s2, [#allocation4]
    $region21: #{tpu_custom_call.1} parent=1 // pred_fallthru
      _
    // Predicated region
    $region22: #{tpu_custom_call.1} parent=1 // pred_check
      _
    $region23: #{tpu_custom_call.1} parent=1 // pred_check_branch
      %188 = sbr.rel (0) target = $region25
    $region24: #{tpu_custom_call.1} parent=1 // pred_region
      %189 = dma.done [#allocation4], 256
    $region25: #{tpu_custom_call.1} parent=1 // pred_fallthru
      _
    %190 = vsyncpa [#allocation3], 1
    %191 = vsyncpa [#allocation6], 1
    %192 = vsyncpa [#allocation4], 1

// kernel: tpu_custom_call.1
$region0: #{tpu_custom_call.1}
  #allocation0 [shape = 'u32[]', space=smem, size = 0x4, offset = 0x4, fixed_abs, tag = 'smem constant byte address 0x4 - core index']
  #allocation1 [shape = 'u32[144,128]{1,0:T(1,128)}', space=vmem, size = 0x12000, scoped, tag = 'internal scratch']
  %s0 = inlined_call_operand.hbm [shape: f32[256,256], index: 0, kind: input, shape index: {}]
  %s1 = inlined_call_operand.hbm [shape: f32[8,256], index: 1, kind: input, shape index: {}]
  %s2 = inlined_call_operand.hbm [shape: f32[8,256], index: 2, kind: output, shape index: {}]
  %s3 = sld [smem:[#allocation0]]
  $region26: #{tpu_custom_call.1} parent=0
    _
  %s5 = ssub.s32 1, %s3
  %s6 = scalar_select 0, %s5, %s3
  $region1: #{tpu_custom_call.1} parent=0
    #allocation2 [shape = 'u8[262144]{0}', space=vmem, size = 0x40000, scoped, tag = 'input window, operand 0, single buffered']
    #allocation3 [shape = 's32[1]{0}', space=sflag, size = 0x4, scoped, tag = 'scoped memory for tpu_custom_call.1']
    #allocation4 [shape = 's32[1]{0}', space=sflag, size = 0x4, scoped, tag = 'scoped memory for tpu_custom_call.1']
    #allocation5 [shape = 'u8[8192]{0}', space=vmem, size = 0x2000, scoped, tag = 'input window, operand 1, single buffered']
    #allocation6 [shape = 's32[1]{0}', space=sflag, size = 0x4, scoped, tag = 'scoped memory for tpu_custom_call.1']
    #allocation7 [shape = 'u8[8192]{0}', space=vmem, size = 0x2000, scoped, tag = 'output window, operand 0, single buffered']
    %7 = vsyncpa [#allocation3], 0
    %8 = vsyncpa [#allocation6], 0
    %9 = vsyncpa [#allocation4], 0
    // Predicated region
    $region2: #{tpu_custom_call.1} parent=1 // pred_check
      _
    $region3: #{tpu_custom_call.1} parent=1 // pred_check_branch
      %11 = sbr.rel (0) target = $region5
    $region4: #{tpu_custom_call.1} parent=1 // pred_region
      %s13 = ssub.s32 8192, 8192
      %14 = vsyncadd [#allocation3], %s13
      %s15 = sshll.u32 [#allocation2], 4
      %s16 = int_to_ptr.vmem [resolvable:$true] %s15
      %21 = dma.hbm_to_vmem [thread:$0]  %s0, 8192, %s16, [#allocation3], 256, 256, 16
    $region5: #{tpu_custom_call.1} parent=1 // pred_fallthru
      _
    // Predicated region
    $region6: #{tpu_custom_call.1} parent=1 // pred_check
      _
    $region7: #{tpu_custom_call.1} parent=1 // pred_check_branch
      %23 = sbr.rel (0) target = $region9
    $region8: #{tpu_custom_call.1} parent=1 // pred_region
      %s25 = ssub.s32 256, 256
      %26 = vsyncadd [#allocation6], %s25
      %s28 = sshll.u32 [#allocation5], 4
      %s29 = int_to_ptr.vmem [resolvable:$true] %s28
      %31 = dma.hbm_to_vmem [thread:$0]  %s1, 256, %s29, [#allocation6]
    $region9: #{tpu_custom_call.1} parent=1 // pred_fallthru
      _
    // Predicated region
    $region10: #{tpu_custom_call.1} parent=1 // pred_check
      _
    $region11: #{tpu_custom_call.1} parent=1 // pred_check_branch
      %33 = sbr.rel (0) target = $region13
    $region12: #{tpu_custom_call.1} parent=1 // pred_region
      %34 = dma.done [#allocation3], 8192
    $region13: #{tpu_custom_call.1} parent=1 // pred_fallthru
      _
    // Predicated region
    $region14: #{tpu_custom_call.1} parent=1 // pred_check
      _
    $region15: #{tpu_custom_call.1} parent=1 // pred_check_branch
      %36 = sbr.rel (0) target = $region17
    $region16: #{tpu_custom_call.1} parent=1 // pred_region
      %37 = dma.done [#allocation6], 256
    $region17: #{tpu_custom_call.1} parent=1 // pred_fallthru
      _
    %v38 = vld [vmem:[#allocation5] sm:$0xff]
    %v39 = vld [vmem:[#allocation5 + $0x8] sm:$0xff]
    %v40 = vld [vmem:[#allocation2] sm:$0xff]
    %v41 = vld [vmem:[#allocation2 + $0x8] sm:$0xff]
    %v42 = vld [vmem:[#allocation2 + $0x10] sm:$0xff]
    %v43 = vld [vmem:[#allocation2 + $0x18] sm:$0xff]
    %v44 = vld [vmem:[#allocation2 + $0x20] sm:$0xff]
    %v45 = vld [vmem:[#allocation2 + $0x28] sm:$0xff]
    %v46 = vld [vmem:[#allocation2 + $0x30] sm:$0xff]
    %v47 = vld [vmem:[#allocation2 + $0x38] sm:$0xff]
    %v48 = vld [vmem:[#allocation2 + $0x40] sm:$0xff]
    %v49 = vld [vmem:[#allocation2 + $0x48] sm:$0xff]
    %v50 = vld [vmem:[#allocation2 + $0x50] sm:$0xff]
    %v51 = vld [vmem:[#allocation2 + $0x58] sm:$0xff]
    %v52 = vld [vmem:[#allocation2 + $0x60] sm:$0xff]
    %v53 = vld [vmem:[#allocation2 + $0x68] sm:$0xff]
    %v54 = vld [vmem:[#allocation2 + $0x70] sm:$0xff]
    %v55 = vld [vmem:[#allocation2 + $0x78] sm:$0xff]
    %v56 = vld [vmem:[#allocation2 + $0x80] sm:$0xff]
    %v57 = vld [vmem:[#allocation2 + $0x88] sm:$0xff]
    %v58 = vld [vmem:[#allocation2 + $0x90] sm:$0xff]
    %v59 = vld [vmem:[#allocation2 + $0x98] sm:$0xff]
    %v60 = vld [vmem:[#allocation2 + $0xa0] sm:$0xff]
    %v61 = vld [vmem:[#allocation2 + $0xa8] sm:$0xff]
    %v62 = vld [vmem:[#allocation2 + $0xb0] sm:$0xff]
    %v63 = vld [vmem:[#allocation2 + $0xb8] sm:$0xff]
    %v64 = vld [vmem:[#allocation2 + $0xc0] sm:$0xff]
    %v65 = vld [vmem:[#allocation2 + $0xc8] sm:$0xff]
    %v66 = vld [vmem:[#allocation2 + $0xd0] sm:$0xff]
    %v67 = vld [vmem:[#allocation2 + $0xd8] sm:$0xff]
    %v68 = vld [vmem:[#allocation2 + $0xe0] sm:$0xff]
    %v69 = vld [vmem:[#allocation2 + $0xe8] sm:$0xff]
    %v70 = vld [vmem:[#allocation2 + $0xf0] sm:$0xff]
    %v71 = vld [vmem:[#allocation2 + $0xf8] sm:$0xff]
    %v72 = vld [vmem:[#allocation2 + $0x100] sm:$0xff]
    %v73 = vld [vmem:[#allocation2 + $0x108] sm:$0xff]
    %v74 = vld [vmem:[#allocation2 + $0x110] sm:$0xff]
    %v75 = vld [vmem:[#allocation2 + $0x118] sm:$0xff]
    %v76 = vld [vmem:[#allocation2 + $0x120] sm:$0xff]
    %v77 = vld [vmem:[#allocation2 + $0x128] sm:$0xff]
    %v78 = vld [vmem:[#allocation2 + $0x130] sm:$0xff]
    %v79 = vld [vmem:[#allocation2 + $0x138] sm:$0xff]
    %v80 = vld [vmem:[#allocation2 + $0x140] sm:$0xff]
    %v81 = vld [vmem:[#allocation2 + $0x148] sm:$0xff]
    %v82 = vld [vmem:[#allocation2 + $0x150] sm:$0xff]
    %v83 = vld [vmem:[#allocation2 + $0x158] sm:$0xff]
    %v84 = vld [vmem:[#allocation2 + $0x160] sm:$0xff]
    %v85 = vld [vmem:[#allocation2 + $0x168] sm:$0xff]
    %v86 = vld [vmem:[#allocation2 + $0x170] sm:$0xff]
    %v87 = vld [vmem:[#allocation2 + $0x178] sm:$0xff]
    %v88 = vld [vmem:[#allocation2 + $0x180] sm:$0xff]
    %v89 = vld [vmem:[#allocation2 + $0x188] sm:$0xff]
    %v90 = vld [vmem:[#allocation2 + $0x190] sm:$0xff]
    %v91 = vld [vmem:[#allocation2 + $0x198] sm:$0xff]
    %v92 = vld [vmem:[#allocation2 + $0x1a0] sm:$0xff]
    %v93 = vld [vmem:[#allocation2 + $0x1a8] sm:$0xff]
    %v94 = vld [vmem:[#allocation2 + $0x1b0] sm:$0xff]
    %v95 = vld [vmem:[#allocation2 + $0x1b8] sm:$0xff]
    %v96 = vld [vmem:[#allocation2 + $0x1c0] sm:$0xff]
    %v97 = vld [vmem:[#allocation2 + $0x1c8] sm:$0xff]
    %v98 = vld [vmem:[#allocation2 + $0x1d0] sm:$0xff]
    %v99 = vld [vmem:[#allocation2 + $0x1d8] sm:$0xff]
    %v100 = vld [vmem:[#allocation2 + $0x1e0] sm:$0xff]
    %v101 = vld [vmem:[#allocation2 + $0x1e8] sm:$0xff]
    %v102 = vld [vmem:[#allocation2 + $0x1f0] sm:$0xff]
    %v103 = vld [vmem:[#allocation2 + $0x1f8] sm:$0xff]
    %104 = vmatprep.subr.mxu0 %v41
    %105 = vmatpush1.msra.mxu0 %v40
    %106 = vmatprep.subr.mxu0 %v43
    %107 = vmatpush1.msra.mxu0 %v42
    %108 = vmatprep.subr.mxu0 %v45
    %109 = vmatpush1.msra.mxu0 %v44
    %110 = vmatprep.subr.mxu0 %v47
    %111 = vmatpush1.msra.mxu0 %v46
    %112 = vmatprep.subr.mxu0 %v49
    %113 = vmatpush1.msra.mxu0 %v48
    %114 = vmatprep.subr.mxu0 %v51
    %115 = vmatpush1.msra.mxu0 %v50
    %116 = vmatprep.subr.mxu0 %v53
    %117 = vmatpush1.msra.mxu0 %v52
    %118 = vmatprep.subr.mxu0 %v55
    %119 = vmatpush1.msra.mxu0 %v54
    %120 = vmatprep.subr.mxu0 %v57
    %121 = vmatpush1.msra.mxu0 %v56
    %122 = vmatprep.subr.mxu0 %v59
    %123 = vmatpush1.msra.mxu0 %v58
    %124 = vmatprep.subr.mxu0 %v61
    %125 = vmatpush1.msra.mxu0 %v60
    %126 = vmatprep.subr.mxu0 %v63
    %127 = vmatpush1.msra.mxu0 %v62
    %128 = vmatprep.subr.mxu0 %v65
    %129 = vmatpush1.msra.mxu0 %v64
    %130 = vmatprep.subr.mxu0 %v67
    %131 = vmatpush1.msra.mxu0 %v66
    %132 = vmatprep.subr.mxu0 %v69
    %133 = vmatpush1.msra.mxu0 %v68
    %134 = vmatprep.subr.mxu0 %v71
    %135 = vmatpush1.msra.mxu0 %v70
    %136 = vmatprep.subr.mxu0 %v73
    %137 = vmatpush1.msra.mxu0 %v72
    %138 = vmatprep.subr.mxu0 %v75
    %139 = vmatpush1.msra.mxu0 %v74
    %140 = vmatprep.subr.mxu0 %v77
    %141 = vmatpush1.msra.mxu0 %v76
    %142 = vmatprep.subr.mxu0 %v79
    %143 = vmatpush1.msra.mxu0 %v78
    %144 = vmatprep.subr.mxu0 %v81
    %145 = vmatpush1.msra.mxu0 %v80
    %146 = vmatprep.subr.mxu0 %v83
    %147 = vmatpush1.msra.mxu0 %v82
    %148 = vmatprep.subr.mxu0 %v85
    %149 = vmatpush1.msra.mxu0 %v84
    %150 = vmatprep.subr.mxu0 %v87
    %151 = vmatpush1.msra.mxu0 %v86
    %152 = vmatprep.subr.mxu0 %v89
    %153 = vmatpush1.msra.mxu0 %v88
    %154 = vmatprep.subr.mxu0 %v91
    %155 = vmatpush1.msra.mxu0 %v90
    %156 = vmatprep.subr.mxu0 %v93
    %157 = vmatpush1.msra.mxu0 %v92
    %158 = vmatprep.subr.mxu0 %v95
    %159 = vmatpush1.msra.mxu0 %v94
    %160 = vmatprep.subr.mxu0 %v97
    %161 = vmatpush1.msra.mxu0 %v96
    %162 = vmatprep.subr.mxu0 %v99
    %163 = vmatpush1.msra.mxu0 %v98
    %164 = vmatprep.subr.mxu0 %v101
    %165 = vmatpush1.msra.mxu0 %v100
    %166 = vmatprep.subr.mxu0 %v103
    %167 = vmatpush1.msra.mxu0 %v102
    %168 = vmatprep.mubr.f32.mxu0 %v39
    %169 = vmatmul.mubr.f32.gmra.mrb[0].mxu0 %v38
    %v170 = vpop.f32.mrb[0].mxu0
    %v171 = vadd.f32 0.0, %v170
    %v172 = vpop.f32.mrb[0].mxu0
    %v173 = vadd.f32 0.0, %v172
    %174 = vdwg.mxu0
    %175 = vst [vmem:[#allocation7] sm:$0xff] %v171
    %176 = vst [vmem:[#allocation7 + $0x8] sm:$0xff] %v173
    // Predicated region
    $region18: #{tpu_custom_call.1} parent=1 // pred_check
      _
    $region19: #{tpu_custom_call.1} parent=1 // pred_check_branch
      %178 = sbr.rel (0) target = $region21
    $region20: #{tpu_custom_call.1} parent=1 // pred_region
      %s180 = ssub.s32 256, 256
      %181 = vsyncadd [#allocation4], %s180
      %s183 = sshll.u32 [#allocation7], 4
      %s184 = int_to_ptr.vmem [resolvable:$true] %s183
      %186 = dma.vmem_to_hbm [thread:$0]  %s184, 256, %s2, [#allocation4]
    $region21: #{tpu_custom_call.1} parent=1 // pred_fallthru
      _
    // Predicated region
    $region22: #{tpu_custom_call.1} parent=1 // pred_check
      _
    $region23: #{tpu_custom_call.1} parent=1 // pred_check_branch
      %188 = sbr.rel (0) target = $region25
    $region24: #{tpu_custom_call.1} parent=1 // pred_region
      %189 = dma.done [#allocation4], 256
    $region25: #{tpu_custom_call.1} parent=1 // pred_fallthru
      _
    %190 = vsyncpa [#allocation3], 1
    %191 = vsyncpa [#allocation6], 1
    %192 = vsyncpa [#allocation4], 1

</llo_original>
